<compile_context>
chip_gen: v7x
topology: tpu7x:2x2x1
jax: 0.10.0
libtpu: 0.0.40
codegen_flags: <defaults>
</compile_context>

<pallas_src>
import functools

import jax
import jax.numpy as jnp
from jax.experimental import pallas as pl
from jax.experimental.pallas import tpu as pltpu


def _divisors(n):
    return [t for t in range(1, n + 1) if n % t == 0]


def _cyclic_shift_kernel(x_ref, o_ref, *, tb, dh, dwc):
    """Blocks are (TB, TH, TWC) tiles of the merged (B, H, W*C) layout."""
    if dh == 0 and dwc == 0:
        # Both rolls folded into DMA addressing: pure streaming copy.
        o_ref[...] = x_ref[...]
        return
    for i in range(tb):                               # static unroll over batch planes
        x = x_ref[i]                                  # (TH, TWC)
        if dh:
            x = pltpu.roll(x, shift=dh, axis=0)       # sublane roll (XLU)
        if dwc:
            x = pltpu.roll(x, shift=dwc, axis=1)      # lane roll (XLU)
        o_ref[i] = x                                  # single store per plane


def cyclic_shift(x, displacement):
    """Pallas equivalent of CyclicShift(displacement)(x) for x of shape (B, H, W, C)."""
    B, H, W, C = x.shape
    dh = displacement % H                             # Python mod -> [0, H)
    dw = displacement % W
    WC = W * C
    dwc = dw * C
    itemsize = jnp.dtype(x.dtype).itemsize

    # --- per-generation VMEM budget ------------------------------------------
    try:
        info = pltpu.get_tpu_info()
        vmem_physical = int(getattr(info, "vmem_capacity_bytes", 64 << 20))
    except Exception:                                  # no TPU info available
        vmem_physical = 64 << 20                       # conservative (v7x per-TC)
    budget = (vmem_physical * 4) // 5                  # ~51 MiB v7x, ~102 MiB v5e/v6e
    headroom = 2 << 20
    max_block_bytes = max(1, (budget - headroom) // 4)  # double-buffered in + out
    soft_cap = 8 << 20                                  # roofline saturates well below

    # --- which rolls can be folded into pure DMA addressing -------------------
    sub_mult = max(8, 32 // itemsize)                  # 8 f32 / 16 bf16 / 32 int8-fp8
    th_cands = [t for t in _divisors(H)
                if dh % t == 0 and (t % sub_mult == 0 or t == H)]
    twc_cands = [t for t in _divisors(WC)
                 if dwc % t == 0 and (t % 128 == 0 or t == WC)]
    h_fold = bool(th_cands)
    w_fold = bool(twc_cands)
    th_opts = th_cands if h_fold else [H]              # in-kernel sublane roll needs full H
    twc_opts = twc_cands if w_fold else [WC]           # in-kernel lane roll needs full W*C

    # --- choose (TB, TH, TWC): fit the VMEM budget, reach >= ~1 MiB blocks,
    #     keep >= 2 (ideally >= 4) grid steps for v7x dual-TC sharding ----------
    best = None
    for tb in _divisors(B):
        for th in th_opts:
            for twc in twc_opts:
                blk = tb * th * twc * itemsize
                if blk > max_block_bytes:
                    continue
                grid_total = (B // tb) * (H // th) * (WC // twc)
                score = (grid_total >= 2,
                         min(blk, 1 << 20),
                         grid_total >= 4,
                         min(blk, soft_cap),
                         -grid_total)
                if best is None or score > best[0]:
                    best = (score, (tb, th, twc))
    if best is None:
        # TODO(synk): a full-extent fallback slab (unfoldable roll on a huge
        # plane) exceeds the VMEM budget; would need a two-pass / element-indexed
        # scheme.  Take the smallest legal block and let the compiler decide.
        tb, th, twc = 1, min(th_opts), min(twc_opts)
    else:
        tb, th, twc = best[1]

    nB, nH, nWC = B // tb, H // th, WC // twc
    sh = (dh // th) % nH if h_fold else 0              # H-roll in block units (DMA)
    sw = (dwc // twc) % nWC if w_fold else 0           # W*C-roll in block units (DMA)
    dh_k = 0 if h_fold else dh                         # residual in-kernel rolls
    dwc_k = 0 if w_fold else dwc

    block_bytes = tb * th * twc * itemsize
    # Deepen input pipelining for small blocks (hides per-step DMA issue latency).
    deep_buffer = (block_bytes <= (512 << 10)
                   and 5 * block_bytes + headroom <= budget)
    in_bufs = 3 if deep_buffer else 2
    vmem_limit = int(min(budget,
                         max((in_bufs + 2) * block_bytes + headroom, 4 << 20)))

    def in_map(b, h, w, nH=nH, nWC=nWC, sh=sh, sw=sw):
        return (b, (h + nH - sh) % nH, (w + nWC - sw) % nWC)

    kernel = functools.partial(_cyclic_shift_kernel, tb=tb, dh=dh_k, dwc=dwc_k)

    x_m = x.reshape(B, H, WC)                          # lane-dense merged layout

    def _call(use_deep_buffering):
        spec_kwargs = {"pipeline_mode": pl.Buffered(3)} if use_deep_buffering else {}
        return pl.pallas_call(
            kernel,
            out_shape=jax.ShapeDtypeStruct((B, H, WC), x.dtype),
            grid_spec=pltpu.PrefetchScalarGridSpec(
                num_scalar_prefetch=0,
                grid=(nB, nH, nWC),
                in_specs=[pl.BlockSpec((tb, th, twc), in_map, **spec_kwargs)],
                out_specs=pl.BlockSpec((tb, th, twc), lambda b, h, w: (b, h, w)),
            ),
            compiler_params=pltpu.CompilerParams(
                dimension_semantics=("parallel", "parallel", "parallel"),
                vmem_limit_bytes=vmem_limit,
            ),
        )(x_m)

    if deep_buffer:
        try:
            return _call(True).reshape(B, H, W, C)
        except Exception:
            pass  # pipeline_mode not honored on this jax build -> plain double buffering
    return _call(False).reshape(B, H, W, C)


if __name__ == "__main__":
    key = jax.random.PRNGKey(0)
    k0, k1 = jax.random.split(key)

    # Main demo shape (Swin-like plane, merged W*C = 512 lanes).
    B, H, W, C = 2, 16, 16, 32
    x = jax.random.normal(k0, (B, H, W, C), dtype=jnp.float32)

    # displacement=4  -> in-kernel sublane H-roll, DMA-folded W-roll
    # displacement=-4 -> negative (reverse) Swin shift
    # displacement=8  -> both rolls folded into DMA addressing (pure copy kernel)
    # displacement=0  -> identity edge case
    for disp in (4, -4, 8, 0):
        out = jax.block_until_ready(cyclic_shift(x, disp))
        ref = jnp.roll(x, shift=(disp, disp), axis=(1, 2))
        assert out.shape == x.shape and out.dtype == x.dtype
        assert jnp.array_equal(out, ref), f"cyclic_shift mismatch for displacement={disp}"

    # bf16, B=1: exercises the dtype-aware (16-row) DMA-folded H-roll path and
    # the >=2-iteration grid guarantee with a single batch element.
    xb = jax.random.normal(k1, (1, 32, 16, 64), dtype=jnp.bfloat16)
    outb = jax.block_until_ready(cyclic_shift(xb, 16))
    refb = jnp.roll(xb, shift=(16, 16), axis=(1, 2))
    assert outb.dtype == xb.dtype
    assert jnp.array_equal(outb, refb), "cyclic_shift mismatch for bf16"

    print("KERNEL_OK")
</pallas_src>

<mosaic_0001>
module attributes {stable_mosaic.version = 11 : i64} {
  func.func @_cyclic_shift_kernel(%arg0: i32, %arg1: i32, %arg2: i32, %arg3: memref<2x16x128xf32, #tpu.memory_space<vmem>>, %arg4: memref<2x16x128xf32, #tpu.memory_space<vmem>>) attributes {dimension_semantics = [#tpu.dimension_semantics<parallel>, #tpu.dimension_semantics<parallel>, #tpu.dimension_semantics<parallel>], iteration_bounds = array<i64: 1, 1, 4>, scalar_prefetch = 0 : i64, scratch_operands = 0 : i64, tpu.core_type = #tpu.core_type<tc>, window_params = [{transform_indices = @transform_0, window_bounds = array<i64: 2, 16, 128>}, {transform_indices = @transform_1, window_bounds = array<i64: 2, 16, 128>}]} {
    %c0 = arith.constant 0 : index
    %c0_0 = arith.constant 0 : index
    %c0_1 = arith.constant 0 : index
    %0 = vector.load %arg3[%c0, %c0_0, %c0_1] : memref<2x16x128xf32, #tpu.memory_space<vmem>>, vector<1x16x128xf32>
    %1 = vector.shape_cast %0 : vector<1x16x128xf32> to vector<16x128xf32>
    %c4_i32 = arith.constant 4 : i32
    %2 = tpu.dynamic_rotate %1 by %c4_i32 dim 0 : vector<16x128xf32>, i32 -> vector<16x128xf32>
    %c0_2 = arith.constant 0 : index
    %c0_3 = arith.constant 0 : index
    %c0_4 = arith.constant 0 : index
    %3 = vector.load %arg4[%c0_2, %c0_3, %c0_4] : memref<2x16x128xf32, #tpu.memory_space<vmem>>, vector<1x16x128xf32>
    %4 = vector.shape_cast %3 : vector<1x16x128xf32> to vector<16x128xf32>
    %5 = vector.shape_cast %2 : vector<16x128xf32> to vector<1x16x128xf32>
    tpu.vector_store %arg4[%c0_2, %c0_3, %c0_4], %5 {strides = array<i32>} : memref<2x16x128xf32, #tpu.memory_space<vmem>>, vector<1x16x128xf32>,
    %c1 = arith.constant 1 : index
    %c0_5 = arith.constant 0 : index
    %c0_6 = arith.constant 0 : index
    %6 = vector.load %arg3[%c1, %c0_5, %c0_6] : memref<2x16x128xf32, #tpu.memory_space<vmem>>, vector<1x16x128xf32>
    %7 = vector.shape_cast %6 : vector<1x16x128xf32> to vector<16x128xf32>
    %c4_i32_7 = arith.constant 4 : i32
    %8 = tpu.dynamic_rotate %7 by %c4_i32_7 dim 0 : vector<16x128xf32>, i32 -> vector<16x128xf32>
    %c1_8 = arith.constant 1 : index
    %c0_9 = arith.constant 0 : index
    %c0_10 = arith.constant 0 : index
    %9 = vector.load %arg4[%c1_8, %c0_9, %c0_10] : memref<2x16x128xf32, #tpu.memory_space<vmem>>, vector<1x16x128xf32>
    %10 = vector.shape_cast %9 : vector<1x16x128xf32> to vector<16x128xf32>
    %11 = vector.shape_cast %8 : vector<16x128xf32> to vector<1x16x128xf32>
    tpu.vector_store %arg4[%c1_8, %c0_9, %c0_10], %11 {strides = array<i32>} : memref<2x16x128xf32, #tpu.memory_space<vmem>>, vector<1x16x128xf32>,
    return
  }
  func.func @transform_0(%arg0: i32, %arg1: i32, %arg2: i32) -> (i32, i32, i32) {
    %c1_i32 = arith.constant 1 : i32
    %0 = arith.addi %arg1, %c1_i32 : i32
    %c0_i32 = arith.constant 0 : i32
    %1 = arith.subi %0, %c0_i32 : i32
    %c1_i32_0 = arith.constant 1 : i32
    %c0_i32_1 = arith.constant 0 : i32
    %2 = arith.cmpi eq, %c1_i32_0, %c0_i32_1 : i32
    %c1_i32_2 = arith.constant 1 : i32
    %3 = arith.select %2, %c1_i32_2, %c1_i32_0 : i32
    %4 = arith.remsi %1, %3 : i32
    %c0_i32_3 = arith.constant 0 : i32
    %5 = arith.cmpi ne, %4, %c0_i32_3 : i32
    %c0_i32_4 = arith.constant 0 : i32
    %6 = arith.cmpi slt, %4, %c0_i32_4 : i32
    %c0_i32_5 = arith.constant 0 : i32
    %7 = arith.cmpi slt, %3, %c0_i32_5 : i32
    %8 = arith.xori %6, %7 : i1
    %9 = arith.andi %8, %5 : i1
    %10 = arith.addi %4, %3 : i32
    %11 = arith.select %9, %10, %4 : i32
    %c4_i32 = arith.constant 4 : i32
    %12 = arith.addi %arg2, %c4_i32 : i32
    %c1_i32_6 = arith.constant 1 : i32
    %13 = arith.subi %12, %c1_i32_6 : i32
    %c4_i32_7 = arith.constant 4 : i32
    %c0_i32_8 = arith.constant 0 : i32
    %14 = arith.cmpi eq, %c4_i32_7, %c0_i32_8 : i32
    %c1_i32_9 = arith.constant 1 : i32
    %15 = arith.select %14, %c1_i32_9, %c4_i32_7 : i32
    %16 = arith.remsi %13, %15 : i32
    %c0_i32_10 = arith.constant 0 : i32
    %17 = arith.cmpi ne, %16, %c0_i32_10 : i32
    %c0_i32_11 = arith.constant 0 : i32
    %18 = arith.cmpi slt, %16, %c0_i32_11 : i32
    %c0_i32_12 = arith.constant 0 : i32
    %19 = arith.cmpi slt, %15, %c0_i32_12 : i32
    %20 = arith.xori %18, %19 : i1
    %21 = arith.andi %20, %17 : i1
    %22 = arith.addi %16, %15 : i32
    %23 = arith.select %21, %22, %16 : i32
    %c0_i32_13 = arith.constant 0 : i32
    return %arg0, %11, %23 : i32, i32, i32
  }
  func.func @transform_1(%arg0: i32, %arg1: i32, %arg2: i32) -> (i32, i32, i32) {
    %c0_i32 = arith.constant 0 : i32
    return %arg0, %arg1, %arg2 : i32, i32, i32
  }
}

</mosaic_0001>

<llo_original>
// kernel: tpu_custom_call.1
$region0: #{tpu_custom_call.1}
  #allocation0 [shape = 'u32[]', space=smem, size = 0x4, offset = 0x4, fixed_abs, tag = 'smem constant byte address 0x4 - core index']
  #allocation1 [shape = 'u32[144,128]{1,0:T(1,128)}', space=vmem, size = 0x12000, scoped, tag = 'internal scratch']
  %s0 = inlined_call_operand.hbm [shape: f32[2,16,512], index: 0, kind: input, shape index: {}]
  %s1 = inlined_call_operand.hbm [shape: f32[2,16,512], index: 1, kind: output, shape index: {}]
  %s2 = sld [smem:[#allocation0]]
  $region41: #{tpu_custom_call.1} parent=0
    _
  %s4 = ssub.s32 1, %s2
  %s5 = scalar_select 0, %s4, %s2
  $region1: #{tpu_custom_call.1} parent=0
    #allocation2 [shape = 'u8[32768]{0}', space=vmem, size = 0x8000, scoped, tag = 'input window, operand 0']
    #allocation3 [shape = 's32[2]{0}', space=sflag, size = 0x8, scoped, tag = 'scoped memory for tpu_custom_call.1']
    #allocation4 [shape = 's32[2]{0}', space=sflag, size = 0x8, scoped, tag = 'scoped memory for tpu_custom_call.1']
    #allocation5 [shape = 'u8[32768]{0}', space=vmem, size = 0x8000, scoped, tag = 'output window, operand 0']
    %6 = vsyncpa [#allocation3], 0
    %s7 = scalar_lea.sflag [#allocation3], 1
    %8 = vsyncpa %s7, 0
    %9 = vsyncpa [#allocation4], 0
    %s10 = scalar_lea.sflag [#allocation4], 1
    %11 = vsyncpa %s10, 0
    loop: start=0, step=1, limit=6
    $region2: #{tpu_custom_call.1} parent=1 // loop_pre_header
      _
    $region3: #{tpu_custom_call.1} parent=1 // loop_header
      %s13 = sphi 0, %s17
      %p14 = scmp.ge.s32.totalorder %s13, 6
      %s20 = sphi 0, %s39
      %s21 = sphi 0, %s35
      %s22 = sphi 0, %s31
      %s23 = sphi 0, %s20
      %s24 = sphi 0, %s21
      %s25 = sphi 0, %s22
      %s26 = sphi 0, %s23
      %s27 = sphi 0, %s24
      %s28 = sphi 0, %s25
      %s70 = sphi 0, %s72
      %s73 = sphi 0, %s70
      %s74 = sphi 0, %s73
      %s90 = sphi 0, %s74
      %s100 = sphi 0, %s102
      %s103 = sphi 0, %s100
      %s104 = sphi 0, %s103
      %s120 = sphi 0, %s104
    $region4: #{tpu_custom_call.1} parent=1 // loop_header_branch
      %16 = sbr.rel (%p14) target = $region8
    $region5: #{tpu_custom_call.1} parent=1 // loop_body
      %s18 = ssub.s32 %s13, 1
      %s19 = ssub.s32 %s13, 2
      %s29 = sadd.s32 1, %s22
      %p30 = scmp.ge.s32.totalorder %s29, 4
      %s31 = scalar_select %p30, 0, %s29
      %s32 = sadd.s32 1, %s21
      %s33 = scalar_select %p30, %s32, %s21
      %p34 = scmp.ge.s32.totalorder %s33, 1
      %s35 = scalar_select %p34, 0, %s33
      %s36 = sadd.s32 1, %s20
      %s37 = scalar_select %p34, %s36, %s20
      %p38 = scmp.ge.s32.totalorder %s37, 1
      %s39 = scalar_select %p38, 0, %s37
      %s40 = sadd.s32 %s22, 3
      %p41 = scmp.lt.s32.totalorder %s40, 0
      %s42 = ssub.s32 0, %s40
      %s43 = scalar_select %p41, %s42, %s40
      %s44 = sand.u32 %s43, 3
      %s45 = ssub.s32 0, %s44
      %s46 = scalar_select %p41, %s45, %s44
      %p47 = scmp.ne.s32.totalorder %s46, 0
      %p48 = scmp.lt.s32.totalorder %s46, 0
      %p49 = pnand %p48, %p47
      %p50 = pneg %p49
      %s51 = sadd.s32 %s46, 4
      %s52 = scalar_select %p50, %s51, %s46
      %s53 = sadd.s32 %s31, 3
      %p54 = scmp.lt.s32.totalorder %s53, 0
      %s55 = ssub.s32 0, %s53
      %s56 = scalar_select %p54, %s55, %s53
      %s57 = sand.u32 %s56, 3
      %s58 = ssub.s32 0, %s57
      %s59 = scalar_select %p54, %s58, %s57
      %p60 = scmp.ne.s32.totalorder %s59, 0
      %p61 = scmp.lt.s32.totalorder %s59, 0
      %p62 = pnand %p61, %p60
      %p63 = pneg %p62
      %s64 = sadd.s32 %s59, 4
      %s65 = scalar_select %p63, %s64, %s59
      %s66 = ssub.s32 %s20, %s39
      %s67 = ssub.s32 %s52, %s65
      %s68 = sor.u32 %s66, %s67
      %p69 = scmp.eq.s32.totalorder %s68, 0
      %s71 = sadd.s32 %s70, 1
      %s72 = scalar_select %p69, %s70, %s71
      %p75 = pneg %p69
      %p76 = scmp.eq.s32.totalorder %s13, 3
      %p77 = por %p75, %p76
      %p78 = scmp.ne.s32.totalorder %s70, %s73
      %p79 = scmp.eq.s32.totalorder %s13, 0
      %p80 = por %p78, %p79
      %p81 = scmp.ne.s32.totalorder %s70, %s73
      %p82 = scmp.eq.s32.totalorder %s18, 3
      %p83 = por %p81, %p82
      %p84 = scmp.ne.s32.totalorder %s73, %s74
      %p85 = scmp.eq.s32.totalorder %s18, 0
      %p86 = por %p84, %p85
      %p87 = scmp.ne.s32.totalorder %s73, %s74
      %p88 = scmp.eq.s32.totalorder %s19, 3
      %p89 = por %p87, %p88
      %p91 = scmp.ne.s32.totalorder %s74, %s90
      %p92 = scmp.eq.s32.totalorder %s19, 0
      %p93 = por %p91, %p92
      %s94 = ssub.s32 %s20, %s39
      %s95 = ssub.s32 %s21, %s35
      %s96 = sor.u32 %s94, %s95
      %s97 = ssub.s32 %s22, %s31
      %s98 = sor.u32 %s96, %s97
      %p99 = scmp.eq.s32.totalorder %s98, 0
      %s101 = sadd.s32 %s100, 1
      %s102 = scalar_select %p99, %s100, %s101
      %p105 = pneg %p99
      %p106 = scmp.eq.s32.totalorder %s13, 3
      %p107 = por %p105, %p106
      %p108 = scmp.ne.s32.totalorder %s100, %s103
      %p109 = scmp.eq.s32.totalorder %s13, 0
      %p110 = por %p108, %p109
      %p111 = scmp.ne.s32.totalorder %s100, %s103
      %p112 = scmp.eq.s32.totalorder %s18, 3
      %p113 = por %p111, %p112
      %p114 = scmp.ne.s32.totalorder %s103, %s104
      %p115 = scmp.eq.s32.totalorder %s18, 0
      %p116 = por %p114, %p115
      %p117 = scmp.ne.s32.totalorder %s103, %s104
      %p118 = scmp.eq.s32.totalorder %s19, 3
      %p119 = por %p117, %p118
      %p121 = scmp.ne.s32.totalorder %s104, %s120
      %p122 = scmp.eq.s32.totalorder %s19, 0
      %p123 = por %p121, %p122
      %p124 = scmp.le.s32.totalorder 1, %s13
      %p125 = scmp.lt.s32.totalorder %s13, 5
      %p126 = pnand %p124, %p125
      %p127 = pneg %p126
      // Predicated region
      $region9: #{tpu_custom_call.1} parent=5 // pred_check
        _
      $region10: #{tpu_custom_call.1} parent=5 // pred_check_branch
        %129 = sbr.rel (%p126) target = $region12
      $region11: #{tpu_custom_call.1} parent=5 // pred_region
        %s130 = ssub.s32 %s13, 1
      $region12: #{tpu_custom_call.1} parent=5 // pred_fallthru
        _
      %p131 = scmp.lt.s32.totalorder %s13, 4
      // Predicated region
      $region13: #{tpu_custom_call.1} parent=5 // pred_check
        %p132 = pneg %p131
      $region14: #{tpu_custom_call.1} parent=5 // pred_check_branch
        %134 = sbr.rel (%p132) target = $region16
      $region15: #{tpu_custom_call.1} parent=5 // pred_region
        // Predicated region
        $region17: #{tpu_custom_call.1} parent=15 // pred_check
          %p135 = pneg %p80
        $region18: #{tpu_custom_call.1} parent=15 // pred_check_branch
          %137 = sbr.rel (%p135) target = $region20
        $region19: #{tpu_custom_call.1} parent=15 // pred_region
          %s138 = sand.u32 %s70, 1
          %s139 = scalar_lea.sflag [#allocation3], %s138
          %s140 = sand.u32 %s70, 1
          %s141 = smul.addr %s140, 32
          %s142 = scalar_lea.vmem [#allocation2], %s141
          %s143 = sadd.s32 %s22, 3
          %p144 = scmp.lt.s32.totalorder %s143, 0
          %s145 = ssub.s32 0, %s143
          %s146 = scalar_select %p144, %s145, %s143
          %s147 = sand.u32 %s146, 3
          %s148 = ssub.s32 0, %s147
          %s149 = scalar_select %p144, %s148, %s147
          %p150 = scmp.ne.s32.totalorder %s149, 0
          %p151 = scmp.lt.s32.totalorder %s149, 0
          %p152 = pnand %p151, %p150
          %p153 = pneg %p152
          %s154 = sadd.s32 %s149, 4
          %s155 = scalar_select %p153, %s154, %s149
          %s156 = smul.u32 2, %s20
          %s158 = ssub.s32 512, 512
          %159 = vsyncadd %s139, %s158
          %s160 = smul.addr %s156, 8
          %s161 = sadd.s32 %s155, %s160
          %s162 = smul.addr %s161, 128
          %s163 = scalar_lea.hbm %s0, %s162
          %s164 = sshll.u32 %s142, 4
          %s165 = int_to_ptr.vmem [resolvable:$true] %s164
          %170 = dma.hbm_to_vmem [thread:$0]  %s163, 512, %s165, %s139, 512, 128, 8
        $region20: #{tpu_custom_call.1} parent=15 // pred_fallthru
          _
      $region16: #{tpu_custom_call.1} parent=5 // pred_fallthru
        _
      %p171 = scmp.le.s32.totalorder 1, %s13
      %p172 = scmp.lt.s32.totalorder %s13, 5
      %p173 = pnand %p171, %p172
      %p174 = pneg %p173
      // Predicated region
      $region21: #{tpu_custom_call.1} parent=5 // pred_check
        _
      $region22: #{tpu_custom_call.1} parent=5 // pred_check_branch
        %176 = sbr.rel (%p173) target = $region24
      $region23: #{tpu_custom_call.1} parent=5 // pred_region
        %s177 = ssub.s32 %s13, 1
        %s178 = sand.u32 %s73, 1
        %s179 = scalar_lea.sflag [#allocation3], %s178
        %s180 = sand.u32 %s73, 1
        %s181 = smul.addr %s180, 32
        %s182 = scalar_lea.vmem [#allocation2], %s181
        // Predicated region
        $region25: #{tpu_custom_call.1} parent=23 // pred_check
          %p183 = pneg %p86
        $region26: #{tpu_custom_call.1} parent=23 // pred_check_branch
          %185 = sbr.rel (%p183) target = $region28
        $region27: #{tpu_custom_call.1} parent=23 // pred_region
          %186 = dma.done %s179, 512
        $region28: #{tpu_custom_call.1} parent=23 // pred_fallthru
          _
        %s187 = sand.u32 %s73, 1
        %s188 = scalar_lea.sflag [#allocation3], %s187
        %s189 = sand.u32 %s73, 1
        %s190 = smul.addr %s189, 32
        %s191 = scalar_lea.vmem [#allocation2], %s190
        %p192 = pneg %p86
        %p193 = pneg %p83
        %p194 = pneg %p116
        %p195 = pneg %p113
        %s196 = sand.u32 %s103, 1
        %s197 = scalar_lea.sflag [#allocation4], %s196
        %s198 = sand.u32 %s103, 1
        %s199 = smul.addr %s198, 32
        %s200 = scalar_lea.vmem [#allocation5], %s199
        %s201 = sadd.s32 %s25, 3
        %p202 = scmp.lt.s32.totalorder %s201, 0
        %s203 = ssub.s32 0, %s201
        %s204 = scalar_select %p202, %s203, %s201
        %s205 = sand.u32 %s204, 3
        %s206 = ssub.s32 0, %s205
        %s207 = scalar_select %p202, %s206, %s205
        %p208 = scmp.ne.s32.totalorder %s207, 0
        %p209 = scmp.lt.s32.totalorder %s207, 0
        %p210 = pnand %p209, %p208
        %p211 = pneg %p210
        %s212 = sadd.s32 %s207, 4
        %s213 = scalar_select %p211, %s212, %s207
        %s214 = smul.u32 2, %s23
        %s215 = smul.u32 2, %s23
        %s216 = smul.u32 2, %s24
        %v217 = vld [vmem:[%s182] sm:$0xff]
        %v218 = vld [vmem:[%s182 + $0x8] sm:$0xff]
        %v219 = vrot.slane %v217, 4
        %v220 = vrot.slane %v218, 4
        %v221 = vlaneseq
        %v222 = vshrl.u32 %v221, 7
        %vm223 = vcmp.lt.s32.totalorder %v222, 4
        %v224 = vsel %vm223, %v219, %v220
        %v225 = vsel %vm223, %v220, %v219
        %226 = vst [vmem:[%s200] sm:$0xff] %v225
        %227 = vst [vmem:[%s200 + $0x8] sm:$0xff] %v224
        %s228 = scalar_lea.vmem %s182, 16 [#allocation2]
        %v229 = vld [vmem:[%s228] sm:$0xff]
        %v230 = vld [vmem:[%s228 + $0x8] sm:$0xff]
        %v231 = vrot.slane %v229, 4
        %v232 = vrot.slane %v230, 4
        %v233 = vsel %vm223, %v231, %v232
        %v234 = vsel %vm223, %v232, %v231
        %s235 = scalar_lea.vmem %s200, 16 [#allocation5]
        %236 = vst [vmem:[%s235] sm:$0xff] %v234
        %237 = vst [vmem:[%s235 + $0x8] sm:$0xff] %v233
        %s238 = sand.u32 %s103, 1
        %s239 = scalar_lea.sflag [#allocation4], %s238
        %s240 = sand.u32 %s103, 1
        %s241 = smul.addr %s240, 32
        %s242 = scalar_lea.vmem [#allocation5], %s241
        // Predicated region
        $region29: #{tpu_custom_call.1} parent=23 // pred_check
          %p243 = pneg %p113
        $region30: #{tpu_custom_call.1} parent=23 // pred_check_branch
          %245 = sbr.rel (%p243) target = $region32
        $region31: #{tpu_custom_call.1} parent=23 // pred_region
          %s246 = smul.u32 2, %s23
          %s247 = smul.u32 2, %s24
          %s249 = ssub.s32 512, 512
          %250 = vsyncadd %s239, %s249
          %s251 = smul.addr %s247, 4
          %s252 = sadd.s32 %s25, %s251
          %s253 = smul.addr %s246, 8
          %s254 = sadd.s32 %s252, %s253
          %s255 = smul.addr %s254, 128
          %s256 = scalar_lea.hbm %s1, %s255
          %s257 = sshll.u32 %s242, 4
          %s258 = int_to_ptr.vmem [resolvable:$true] %s257
          %263 = dma.vmem_to_hbm [thread:$0]  %s258, 512, %s256, %s239, 128, 512, 8
        $region32: #{tpu_custom_call.1} parent=23 // pred_fallthru
          _
      $region24: #{tpu_custom_call.1} parent=5 // pred_fallthru
        _
      %p264 = scmp.le.s32.totalorder 2, %s13
      // Predicated region
      $region33: #{tpu_custom_call.1} parent=5 // pred_check
        %p265 = pneg %p264
      $region34: #{tpu_custom_call.1} parent=5 // pred_check_branch
        %267 = sbr.rel (%p265) target = $region36
      $region35: #{tpu_custom_call.1} parent=5 // pred_region
        %s268 = ssub.s32 %s13, 2
        // Predicated region
        $region37: #{tpu_custom_call.1} parent=35 // pred_check
          %p269 = pneg %p119
        $region38: #{tpu_custom_call.1} parent=35 // pred_check_branch
          %271 = sbr.rel (%p269) target = $region40
        $region39: #{tpu_custom_call.1} parent=35 // pred_region
          %s272 = sand.u32 %s104, 1
          %s273 = scalar_lea.sflag [#allocation4], %s272
          %s274 = sand.u32 %s104, 1
          %s275 = smul.addr %s274, 32
          %s276 = scalar_lea.vmem [#allocation5], %s275
          %277 = dma.done %s273, 512
        $region40: #{tpu_custom_call.1} parent=35 // pred_fallthru
          _
      $region36: #{tpu_custom_call.1} parent=5 // pred_fallthru
        _
    $region6: #{tpu_custom_call.1} parent=1 // loop_footer
      %s17 = sadd.s32 1, %s13
    $region7: #{tpu_custom_call.1} parent=1 // loop_footer_branch
      %12 = sbr.rel target = $region3
    $region8: #{tpu_custom_call.1} parent=1 // loop_exit
      _
    %278 = vsyncpa [#allocation3], 1
    %s279 = scalar_lea.sflag [#allocation3], 1
    %280 = vsyncpa %s279, 1
    %281 = vsyncpa [#allocation4], 1
    %s282 = scalar_lea.sflag [#allocation4], 1
    %283 = vsyncpa %s282, 1

</llo_original>
